<compile_context>
chip_gen: v6e
topology: v6e:2x2x1
jax: 0.10.0
libtpu: 0.0.40
codegen_flags: <defaults>
</compile_context>

<pallas_src>
import functools

import jax
import jax.numpy as jnp
from jax.experimental import pallas as pl
from jax.experimental.pallas import tpu as pltpu

EPS = 1e-5  # eps added to std (NOT to variance), exactly as in the module


# ------------------------------ Pallas kernel ------------------------------- #

def _layernorm_kernel(x_ref, g_ref, b_ref, o_ref, *, eps, n_valid, padded):
    # x_ref block: (TB, R, L) — TB samples, each flattened to a lane-dense
    # (R, 128) slab.  Stats are permutation invariant, so this layout is exact.
    xf = x_ref[...].astype(jnp.float32)                     # (TB, R, L)
    _, R, L = xf.shape
    n = n_valid                                             # true feature count (static)

    # Pass 1: per-sample mean (zero padding contributes nothing to the sum).
    mean = jnp.sum(xf, axis=(1, 2), keepdims=True) * (1.0 / n)   # (TB, 1, 1)

    # Pass 2: per-sample unbiased variance over the valid elements only.
    d = xf - mean
    if padded:
        row = jax.lax.broadcasted_iota(jnp.int32, (R, L), 0)
        col = jax.lax.broadcasted_iota(jnp.int32, (R, L), 1)
        valid = (row * L + col < n)[None, :, :]
        d = jnp.where(valid, d, 0.0)
    denom = (n - 1) if n > 1 else 1      # torch.std unbiased; guard degenerate n == 1
    var = jnp.sum(d * d, axis=(1, 2), keepdims=True) * (1.0 / denom)

    inv = 1.0 / (jnp.sqrt(var) + eps)                       # eps on std, not var
    scale = g_ref[...][None, :, :] * inv                    # fold 1/(std+eps) into gamma
    shift = b_ref[...][None, :, :] - mean * scale

    # Re-read x from VMEM for the normalize/store pass (3 vld/cycle, fully
    # hidden under the HBM-bound stream) instead of keeping `xf` live.
    o_ref[...] = (x_ref[...].astype(jnp.float32) * scale + shift).astype(o_ref.dtype)


# --------------------------------- wrapper ---------------------------------- #

def layer_norm(x, gamma, beta, *, eps=EPS):
    """Forward of the custom PyTorch LayerNorm.

    x:     (N, C, *spatial), channel axis is dim 1 (any rank >= 2)
    gamma: (C,)   beta: (C,)
    Per-sample mean / unbiased std over all non-batch features; eps added to
    std; per-channel affine.  (The module's N==1 branch is numerically
    identical to the per-sample path, so no special case is needed.)
    """
    orig_shape = x.shape
    orig_dtype = x.dtype
    N, C = x.shape[0], x.shape[1]
    F = 1
    for d in x.shape[1:]:
        F *= d
    spatial = F // C

    # Lane-dense per-sample layout: (R, 128), zero-padding the feature tail.
    L = 128
    R = -(-F // L)
    F_pad = R * L

    xf = x.reshape(N, F)                       # native dtype, no wrapper cast
    if F_pad != F:
        xf = jnp.pad(xf, ((0, 0), (0, F_pad - F)))
    x2 = xf.reshape(N, R, L)

    # Pre-broadcast affine params once to the flattened feature layout (tiny).
    gflat = jnp.broadcast_to(gamma.reshape(C, 1).astype(jnp.float32),
                             (C, spatial)).reshape(F)
    bflat = jnp.broadcast_to(beta.reshape(C, 1).astype(jnp.float32),
                             (C, spatial)).reshape(F)
    if F_pad != F:
        gflat = jnp.pad(gflat, (0, F_pad - F))
        bflat = jnp.pad(bflat, (0, F_pad - F))
    g2 = gflat.reshape(R, L)
    b2 = bflat.reshape(R, L)

    # Batch samples per grid step: target ~2 MiB of x per block (4x for
    # double-buffered in+out stays under v5e's 16 MiB scoped VMEM default and
    # amortizes per-step overhead to <10% on v6e/v7x).
    bytes_per_sample = F_pad * x2.dtype.itemsize
    TARGET_BYTES = 2 << 20
    TB = max(1, min(N, TARGET_BYTES // max(bytes_per_sample, 1)))
    if N >= 2:
        # keep at least 2 grid steps so both v7x TensorCores are used
        TB = min(TB, -(-N // 2))
    num_steps = -(-N // TB)
    N_pad = num_steps * TB
    if N_pad != N:
        x2 = jnp.pad(x2, ((0, N_pad - N), (0, 0), (0, 0)))

    out = pl.pallas_call(
        functools.partial(_layernorm_kernel, eps=eps, n_valid=F,
                          padded=(F_pad != F)),
        out_shape=jax.ShapeDtypeStruct((N_pad, R, L), orig_dtype),
        grid=(num_steps,),
        in_specs=[
            pl.BlockSpec((TB, R, L), lambda i: (i, 0, 0)),
            pl.BlockSpec((R, L), lambda i: (0, 0)),   # gamma stays resident
            pl.BlockSpec((R, L), lambda i: (0, 0)),   # beta stays resident
        ],
        out_specs=pl.BlockSpec((TB, R, L), lambda i: (i, 0, 0)),
        compiler_params=pltpu.CompilerParams(
            dimension_semantics=("parallel",)),
    )(x2, g2, b2)

    # TODO(synk): if a single sample's features exceed the ~2 MiB block target
    # by a large margin (F >> 10^6), tile the feature axis with an
    # accumulator/two-pass scheme instead of one per-sample block.
    out = out[:N].reshape(N, F_pad)[:, :F].reshape(orig_shape)
    return out


# --------------------------- pure-JAX reference ----------------------------- #

def ref_layernorm(x, gamma, beta, eps=EPS):
    N = x.shape[0]
    flat = x.reshape(N, -1).astype(jnp.float32)
    mean = flat.mean(axis=1)
    var = jnp.sum((flat - mean[:, None]) ** 2, axis=1) / (flat.shape[1] - 1)
    std = jnp.sqrt(var)
    sh = (N,) + (1,) * (x.ndim - 1)
    xn = (x.astype(jnp.float32) - mean.reshape(sh)) / (std.reshape(sh) + eps)
    gsh = (1, -1) + (1,) * (x.ndim - 2)
    return xn * gamma.reshape(gsh) + beta.reshape(gsh)


# ----------------------------------- main ------------------------------------ #

if __name__ == "__main__":
    key = jax.random.PRNGKey(0)
    k1, k2, k3, k4, k5 = jax.random.split(key, 5)

    # Primary shapes: NCHW conv feature map, as the module is typically used.
    N, C, H, W = 2, 4, 16, 16
    x = jax.random.normal(k1, (N, C, H, W), jnp.float32)
    gamma = jax.random.uniform(k2, (C,), jnp.float32)        # module: .uniform_()
    beta = 0.1 * jax.random.normal(k3, (C,), jnp.float32)    # nonzero for a stronger check

    out = jax.block_until_ready(layer_norm(x, gamma, beta))
    ref = ref_layernorm(x, gamma, beta)
    assert out.shape == x.shape, out.shape
    err = float(jnp.max(jnp.abs(out - ref)))
    assert err < 1e-3, f"max abs err {err}"

    # Secondary check: odd batch + feature count not a multiple of 128
    # (exercises feature zero-padding, stat masking, and batch padding).
    N2, C2, H2, W2 = 3, 5, 10, 10
    x2 = jax.random.normal(k4, (N2, C2, H2, W2), jnp.float32)
    g2 = jax.random.uniform(k5, (C2,), jnp.float32)
    b2 = jnp.zeros((C2,), jnp.float32)
    out2 = jax.block_until_ready(layer_norm(x2, g2, b2))
    err2 = float(jnp.max(jnp.abs(out2 - ref_layernorm(x2, g2, b2))))
    assert err2 < 1e-3, f"max abs err {err2}"

    # Tertiary check: bf16 input stays bf16 end-to-end (no wrapper casts).
    xb = x.astype(jnp.bfloat16)
    out3 = jax.block_until_ready(layer_norm(xb, gamma, beta))
    assert out3.dtype == jnp.bfloat16, out3.dtype
    ref3 = ref_layernorm(xb.astype(jnp.float32), gamma, beta)
    err3 = float(jnp.max(jnp.abs(out3.astype(jnp.float32) - ref3)))
    assert err3 < 5e-2, f"max abs err {err3}"

    print("KERNEL_OK")
</pallas_src>

<mosaic_0001>
module attributes {stable_mosaic.version = 11 : i64} {
  func.func @_layernorm_kernel(%arg0: i32, %arg1: memref<1x8x128xf32, #tpu.memory_space<vmem>>, %arg2: memref<8x128xf32, #tpu.memory_space<vmem>>, %arg3: memref<8x128xf32, #tpu.memory_space<vmem>>, %arg4: memref<1x8x128xf32, #tpu.memory_space<vmem>>) attributes {dimension_semantics = [#tpu.dimension_semantics<parallel>], iteration_bounds = array<i64: 2>, scalar_prefetch = 0 : i64, scratch_operands = 0 : i64, tpu.core_type = #tpu.core_type<tc>, window_params = [{transform_indices = @transform_0, window_bounds = array<i64: 1, 8, 128>}, {pipeline_mode = #tpu.pipeline_mode<synchronous>, transform_indices = @transform_1, window_bounds = array<i64: 8, 128>}, {pipeline_mode = #tpu.pipeline_mode<synchronous>, transform_indices = @transform_2, window_bounds = array<i64: 8, 128>}, {transform_indices = @transform_3, window_bounds = array<i64: 1, 8, 128>}]} {
    %c0 = arith.constant 0 : index
    %c0_0 = arith.constant 0 : index
    %c0_1 = arith.constant 0 : index
    %0 = vector.load %arg1[%c0, %c0_0, %c0_1] : memref<1x8x128xf32, #tpu.memory_space<vmem>>, vector<1x8x128xf32>
    %cst = arith.constant dense<0.000000e+00> : vector<1xf32>
    %1 = vector.multi_reduction <add>, %0, %cst [1, 2] : vector<1x8x128xf32> to vector<1xf32>
    %2 = vector.shape_cast %1 : vector<1xf32> to vector<1x1x1xf32>
    %cst_2 = arith.constant 9.765625E-4 : f32
    %3 = vector.broadcast %cst_2 : f32 to vector<1x1x1xf32>
    %4 = arith.mulf %2, %3 : vector<1x1x1xf32>
    %5 = vector.broadcast %4 : vector<1x1x1xf32> to vector<1x8x128xf32>
    %6 = arith.subf %0, %5 : vector<1x8x128xf32>
    %7 = arith.mulf %6, %6 : vector<1x8x128xf32>
    %cst_3 = arith.constant dense<0.000000e+00> : vector<1xf32>
    %8 = vector.multi_reduction <add>, %7, %cst_3 [1, 2] : vector<1x8x128xf32> to vector<1xf32>
    %9 = vector.shape_cast %8 : vector<1xf32> to vector<1x1x1xf32>
    %cst_4 = arith.constant 9.77517105E-4 : f32
    %10 = vector.broadcast %cst_4 : f32 to vector<1x1x1xf32>
    %11 = arith.mulf %9, %10 : vector<1x1x1xf32>
    %12 = math.sqrt %11 : vector<1x1x1xf32>
    %cst_5 = arith.constant 9.99999974E-6 : f32
    %13 = vector.broadcast %cst_5 : f32 to vector<1x1x1xf32>
    %14 = arith.addf %12, %13 : vector<1x1x1xf32>
    %cst_6 = arith.constant 1.000000e+00 : f32
    %15 = vector.broadcast %cst_6 : f32 to vector<1x1x1xf32>
    %16 = arith.divf %15, %14 : vector<1x1x1xf32>
    %c0_7 = arith.constant 0 : index
    %c0_8 = arith.constant 0 : index
    %17 = vector.load %arg2[%c0_7, %c0_8] : memref<8x128xf32, #tpu.memory_space<vmem>>, vector<8x128xf32>
    %18 = vector.shape_cast %17 : vector<8x128xf32> to vector<1x8x128xf32>
    %19 = vector.broadcast %16 : vector<1x1x1xf32> to vector<1x8x128xf32>
    %20 = arith.mulf %18, %19 : vector<1x8x128xf32>
    %c0_9 = arith.constant 0 : index
    %c0_10 = arith.constant 0 : index
    %21 = vector.load %arg3[%c0_9, %c0_10] : memref<8x128xf32, #tpu.memory_space<vmem>>, vector<8x128xf32>
    %22 = vector.shape_cast %21 : vector<8x128xf32> to vector<1x8x128xf32>
    %23 = vector.broadcast %4 : vector<1x1x1xf32> to vector<1x8x128xf32>
    %24 = arith.mulf %23, %20 : vector<1x8x128xf32>
    %25 = arith.subf %22, %24 : vector<1x8x128xf32>
    %c0_11 = arith.constant 0 : index
    %c0_12 = arith.constant 0 : index
    %c0_13 = arith.constant 0 : index
    %26 = vector.load %arg1[%c0_11, %c0_12, %c0_13] : memref<1x8x128xf32, #tpu.memory_space<vmem>>, vector<1x8x128xf32>
    %27 = arith.mulf %26, %20 : vector<1x8x128xf32>
    %28 = arith.addf %27, %25 : vector<1x8x128xf32>
    %c0_14 = arith.constant 0 : index
    %c0_15 = arith.constant 0 : index
    %c0_16 = arith.constant 0 : index
    %29 = vector.load %arg4[%c0_14, %c0_15, %c0_16] : memref<1x8x128xf32, #tpu.memory_space<vmem>>, vector<1x8x128xf32>
    tpu.vector_store %arg4[%c0_14, %c0_15, %c0_16], %28 {strides = array<i32>} : memref<1x8x128xf32, #tpu.memory_space<vmem>>, vector<1x8x128xf32>,
    return
  }
  func.func @transform_0(%arg0: i32) -> (i32, i32, i32) {
    %c0_i32 = arith.constant 0 : i32
    %c0_i32_0 = arith.constant 0 : i32
    %c0_i32_1 = arith.constant 0 : i32
    return %arg0, %c0_i32, %c0_i32_0 : i32, i32, i32
  }
  func.func @transform_1(%arg0: i32) -> (i32, i32) {
    %c0_i32 = arith.constant 0 : i32
    %c0_i32_0 = arith.constant 0 : i32
    %c0_i32_1 = arith.constant 0 : i32
    return %c0_i32, %c0_i32_0 : i32, i32
  }
  func.func @transform_2(%arg0: i32) -> (i32, i32) {
    %c0_i32 = arith.constant 0 : i32
    %c0_i32_0 = arith.constant 0 : i32
    %c0_i32_1 = arith.constant 0 : i32
    return %c0_i32, %c0_i32_0 : i32, i32
  }
  func.func @transform_3(%arg0: i32) -> (i32, i32, i32) {
    %c0_i32 = arith.constant 0 : i32
    %c0_i32_0 = arith.constant 0 : i32
    %c0_i32_1 = arith.constant 0 : i32
    return %arg0, %c0_i32, %c0_i32_0 : i32, i32, i32
  }
}

</mosaic_0001>

<llo_original>
// kernel: tpu_custom_call.1
$region0: #{tpu_custom_call.1}
  #allocation0 [shape = 'u32[]', space=smem, size = 0x4, offset = 0x4, fixed_abs, tag = 'smem constant byte address 0x4 - core index']
  #allocation1 [shape = 'u32[144,128]{1,0:T(1,128)}', space=vmem, size = 0x12000, scoped, tag = 'internal scratch']
  %s0 = inlined_call_operand.hbm [shape: f32[2,8,128], index: 0, kind: input, shape index: {}]
  %s1 = inlined_call_operand.hbm [shape: f32[8,128], index: 1, kind: input, shape index: {}]
  %s2 = inlined_call_operand.hbm [shape: f32[8,128], index: 2, kind: input, shape index: {}]
  %s3 = inlined_call_operand.hbm [shape: f32[2,8,128], index: 3, kind: output, shape index: {}]
  %s4 = sld [smem:[#allocation0]]
  $region57: #{tpu_custom_call.1} parent=0
    _
  %s6 = ssub.s32 1, %s4
  %s7 = scalar_select 0, %s6, %s4
  $region1: #{tpu_custom_call.1} parent=0
    #allocation2 [shape = 'u8[8192]{0}', space=vmem, size = 0x2000, scoped, tag = 'input window, operand 0']
    #allocation3 [shape = 's32[2]{0}', space=sflag, size = 0x8, scoped, tag = 'scoped memory for tpu_custom_call.1']
    #allocation4 [shape = 's32[2]{0}', space=sflag, size = 0x8, scoped, tag = 'scoped memory for tpu_custom_call.1']
    #allocation5 [shape = 'u8[4096]{0}', space=vmem, size = 0x1000, scoped, tag = 'input window, operand 1, single buffered']
    #allocation6 [shape = 's32[1]{0}', space=sflag, size = 0x4, scoped, tag = 'scoped memory for tpu_custom_call.1']
    #allocation7 [shape = 'u8[4096]{0}', space=vmem, size = 0x1000, scoped, tag = 'input window, operand 2, single buffered']
    #allocation8 [shape = 'u8[8192]{0}', space=vmem, size = 0x2000, scoped, tag = 'output window, operand 0']
    %8 = vsyncpa [#allocation3], 0
    %s9 = scalar_lea.sflag [#allocation3], 1
    %10 = vsyncpa %s9, 0
    %11 = vsyncpa [#allocation6], 0
    %12 = vsyncpa [#allocation4], 0
    %s13 = scalar_lea.sflag [#allocation4], 1
    %14 = vsyncpa %s13, 0
    loop: start=0, step=1, limit=4
    $region2: #{tpu_custom_call.1} parent=1 // loop_pre_header
      _
    $region3: #{tpu_custom_call.1} parent=1 // loop_header
      %s16 = sphi 0, %s20
      %p17 = scmp.ge.s32.totalorder %s16, 4
      %s26 = sphi 0, %s28
      %s29 = sphi 0, %s26
      %s30 = sphi 0, %s29
      %s46 = sphi 0, %s30
      %s50 = sphi 0, %s50
      %s52 = sphi 0, %s50
      %s53 = sphi 0, %s52
      %s67 = sphi 0, %s53
      %s71 = sphi 0, %s71
      %s73 = sphi 0, %s71
      %s74 = sphi 0, %s73
      %s88 = sphi 0, %s74
      %s94 = sphi 0, %s96
      %s97 = sphi 0, %s94
      %s98 = sphi 0, %s97
      %s114 = sphi 0, %s98
    $region4: #{tpu_custom_call.1} parent=1 // loop_header_branch
      %19 = sbr.rel (%p17) target = $region8
    $region5: #{tpu_custom_call.1} parent=1 // loop_body
      %s21 = ssub.s32 %s16, 1
      %s22 = ssub.s32 %s16, 2
      %s23 = sadd.s32 %s16, 1
      %s24 = ssub.s32 %s16, %s23
      %p25 = scmp.eq.s32.totalorder %s24, 0
      %s27 = sadd.s32 %s26, 1
      %s28 = scalar_select %p25, %s26, %s27
      %p31 = pneg %p25
      %p32 = scmp.eq.s32.totalorder %s16, 1
      %p33 = por %p31, %p32
      %p34 = scmp.ne.s32.totalorder %s26, %s29
      %p35 = scmp.eq.s32.totalorder %s16, 0
      %p36 = por %p34, %p35
      %p37 = scmp.ne.s32.totalorder %s26, %s29
      %p38 = scmp.eq.s32.totalorder %s21, 1
      %p39 = por %p37, %p38
      %p40 = scmp.ne.s32.totalorder %s29, %s30
      %p41 = scmp.eq.s32.totalorder %s21, 0
      %p42 = por %p40, %p41
      %p43 = scmp.ne.s32.totalorder %s29, %s30
      %p44 = scmp.eq.s32.totalorder %s22, 1
      %p45 = por %p43, %p44
      %p47 = scmp.ne.s32.totalorder %s30, %s46
      %p48 = scmp.eq.s32.totalorder %s22, 0
      %p49 = por %p47, %p48
      %s51 = sadd.s32 %s50, 1
      %p54 = scmp.eq.s32.totalorder %s16, 1
      %p55 = scmp.ne.s32.totalorder %s50, %s52
      %p56 = scmp.eq.s32.totalorder %s16, 0
      %p57 = por %p55, %p56
      %p58 = scmp.ne.s32.totalorder %s50, %s52
      %p59 = scmp.eq.s32.totalorder %s21, 1
      %p60 = por %p58, %p59
      %p61 = scmp.ne.s32.totalorder %s52, %s53
      %p62 = scmp.eq.s32.totalorder %s21, 0
      %p63 = por %p61, %p62
      %p64 = scmp.ne.s32.totalorder %s52, %s53
      %p65 = scmp.eq.s32.totalorder %s22, 1
      %p66 = por %p64, %p65
      %p68 = scmp.ne.s32.totalorder %s53, %s67
      %p69 = scmp.eq.s32.totalorder %s22, 0
      %p70 = por %p68, %p69
      %s72 = sadd.s32 %s71, 1
      %p75 = scmp.eq.s32.totalorder %s16, 1
      %p76 = scmp.ne.s32.totalorder %s71, %s73
      %p77 = scmp.eq.s32.totalorder %s16, 0
      %p78 = por %p76, %p77
      %p79 = scmp.ne.s32.totalorder %s71, %s73
      %p80 = scmp.eq.s32.totalorder %s21, 1
      %p81 = por %p79, %p80
      %p82 = scmp.ne.s32.totalorder %s73, %s74
      %p83 = scmp.eq.s32.totalorder %s21, 0
      %p84 = por %p82, %p83
      %p85 = scmp.ne.s32.totalorder %s73, %s74
      %p86 = scmp.eq.s32.totalorder %s22, 1
      %p87 = por %p85, %p86
      %p89 = scmp.ne.s32.totalorder %s74, %s88
      %p90 = scmp.eq.s32.totalorder %s22, 0
      %p91 = por %p89, %p90
      %s92 = ssub.s32 %s16, %s23
      %p93 = scmp.eq.s32.totalorder %s92, 0
      %s95 = sadd.s32 %s94, 1
      %s96 = scalar_select %p93, %s94, %s95
      %p99 = pneg %p93
      %p100 = scmp.eq.s32.totalorder %s16, 1
      %p101 = por %p99, %p100
      %p102 = scmp.ne.s32.totalorder %s94, %s97
      %p103 = scmp.eq.s32.totalorder %s16, 0
      %p104 = por %p102, %p103
      %p105 = scmp.ne.s32.totalorder %s94, %s97
      %p106 = scmp.eq.s32.totalorder %s21, 1
      %p107 = por %p105, %p106
      %p108 = scmp.ne.s32.totalorder %s97, %s98
      %p109 = scmp.eq.s32.totalorder %s21, 0
      %p110 = por %p108, %p109
      %p111 = scmp.ne.s32.totalorder %s97, %s98
      %p112 = scmp.eq.s32.totalorder %s22, 1
      %p113 = por %p111, %p112
      %p115 = scmp.ne.s32.totalorder %s98, %s114
      %p116 = scmp.eq.s32.totalorder %s22, 0
      %p117 = por %p115, %p116
      %p118 = scmp.le.s32.totalorder 1, %s16
      %p119 = scmp.lt.s32.totalorder %s16, 3
      %p120 = pnand %p118, %p119
      %p121 = pneg %p120
      // Predicated region
      $region9: #{tpu_custom_call.1} parent=5 // pred_check
        _
      $region10: #{tpu_custom_call.1} parent=5 // pred_check_branch
        %123 = sbr.rel (%p120) target = $region12
      $region11: #{tpu_custom_call.1} parent=5 // pred_region
        %s124 = ssub.s32 %s16, 1
        // Predicated region
        $region13: #{tpu_custom_call.1} parent=11 // pred_check
          %p125 = pneg %p63
        $region14: #{tpu_custom_call.1} parent=11 // pred_check_branch
          %127 = sbr.rel (%p125) target = $region16
        $region15: #{tpu_custom_call.1} parent=11 // pred_region
          %s129 = ssub.s32 128, 128
          %130 = vsyncadd [#allocation6], %s129
          %s132 = sshll.u32 [#allocation5], 4
          %s133 = int_to_ptr.vmem [resolvable:$true] %s132
          %135 = dma.hbm_to_vmem [thread:$0]  %s1, 128, %s133, [#allocation6]
        $region16: #{tpu_custom_call.1} parent=11 // pred_fallthru
          _
        // Predicated region
        $region17: #{tpu_custom_call.1} parent=11 // pred_check
          %p136 = pneg %p84
        $region18: #{tpu_custom_call.1} parent=11 // pred_check_branch
          %138 = sbr.rel (%p136) target = $region20
        $region19: #{tpu_custom_call.1} parent=11 // pred_region
          %s140 = ssub.s32 128, 128
          %141 = vsyncadd [#allocation6], %s140
          %s143 = sshll.u32 [#allocation7], 4
          %s144 = int_to_ptr.vmem [resolvable:$true] %s143
          %146 = dma.hbm_to_vmem [thread:$0]  %s2, 128, %s144, [#allocation6]
        $region20: #{tpu_custom_call.1} parent=11 // pred_fallthru
          _
      $region12: #{tpu_custom_call.1} parent=5 // pred_fallthru
        _
      %p147 = scmp.lt.s32.totalorder %s16, 2
      // Predicated region
      $region21: #{tpu_custom_call.1} parent=5 // pred_check
        %p148 = pneg %p147
      $region22: #{tpu_custom_call.1} parent=5 // pred_check_branch
        %150 = sbr.rel (%p148) target = $region24
      $region23: #{tpu_custom_call.1} parent=5 // pred_region
        // Predicated region
        $region25: #{tpu_custom_call.1} parent=23 // pred_check
          %p151 = pneg %p36
        $region26: #{tpu_custom_call.1} parent=23 // pred_check_branch
          %153 = sbr.rel (%p151) target = $region28
        $region27: #{tpu_custom_call.1} parent=23 // pred_region
          %s154 = sand.u32 %s26, 1
          %s155 = scalar_lea.sflag [#allocation3], %s154
          %s156 = sand.u32 %s26, 1
          %s157 = smul.addr %s156, 8
          %s158 = scalar_lea.vmem [#allocation2], %s157
          %s160 = ssub.s32 128, 128
          %161 = vsyncadd %s155, %s160
          %s162 = smul.addr %s16, 128
          %s163 = scalar_lea.hbm %s0, %s162
          %s165 = sshll.u32 %s158, 4
          %s166 = int_to_ptr.vmem [resolvable:$true] %s165
          %168 = dma.hbm_to_vmem [thread:$0]  %s163, 128, %s166, %s155
        $region28: #{tpu_custom_call.1} parent=23 // pred_fallthru
          _
      $region24: #{tpu_custom_call.1} parent=5 // pred_fallthru
        _
      %p169 = scmp.le.s32.totalorder 1, %s16
      %p170 = scmp.lt.s32.totalorder %s16, 3
      %p171 = pnand %p169, %p170
      %p172 = pneg %p171
      // Predicated region
      $region29: #{tpu_custom_call.1} parent=5 // pred_check
        _
      $region30: #{tpu_custom_call.1} parent=5 // pred_check_branch
        %174 = sbr.rel (%p171) target = $region32
      $region31: #{tpu_custom_call.1} parent=5 // pred_region
        %s175 = ssub.s32 %s16, 1
        %s176 = sand.u32 %s29, 1
        %s177 = scalar_lea.sflag [#allocation3], %s176
        %s178 = sand.u32 %s29, 1
        %s179 = smul.addr %s178, 8
        %s180 = scalar_lea.vmem [#allocation2], %s179
        // Predicated region
        $region33: #{tpu_custom_call.1} parent=31 // pred_check
          %p181 = pneg %p42
        $region34: #{tpu_custom_call.1} parent=31 // pred_check_branch
          %183 = sbr.rel (%p181) target = $region36
        $region35: #{tpu_custom_call.1} parent=31 // pred_region
          %184 = dma.done %s177, 128
        $region36: #{tpu_custom_call.1} parent=31 // pred_fallthru
          _
        // Predicated region
        $region37: #{tpu_custom_call.1} parent=31 // pred_check
          %p185 = pneg %p63
        $region38: #{tpu_custom_call.1} parent=31 // pred_check_branch
          %187 = sbr.rel (%p185) target = $region40
        $region39: #{tpu_custom_call.1} parent=31 // pred_region
          %188 = dma.done [#allocation6], 128
        $region40: #{tpu_custom_call.1} parent=31 // pred_fallthru
          _
        // Predicated region
        $region41: #{tpu_custom_call.1} parent=31 // pred_check
          %p189 = pneg %p84
        $region42: #{tpu_custom_call.1} parent=31 // pred_check_branch
          %191 = sbr.rel (%p189) target = $region44
        $region43: #{tpu_custom_call.1} parent=31 // pred_region
          %192 = dma.done [#allocation6], 128
        $region44: #{tpu_custom_call.1} parent=31 // pred_fallthru
          _
        %s193 = sand.u32 %s29, 1
        %s194 = scalar_lea.sflag [#allocation3], %s193
        %s195 = sand.u32 %s29, 1
        %s196 = smul.addr %s195, 8
        %s197 = scalar_lea.vmem [#allocation2], %s196
        %p198 = pneg %p42
        %p199 = pneg %p39
        %p200 = pneg %p63
        %p201 = pneg %p60
        %p202 = pneg %p84
        %p203 = pneg %p81
        %p204 = pneg %p110
        %p205 = pneg %p107
        %s206 = sand.u32 %s97, 1
        %s207 = scalar_lea.sflag [#allocation4], %s206
        %s208 = sand.u32 %s97, 1
        %s209 = smul.addr %s208, 8
        %s210 = scalar_lea.vmem [#allocation8], %s209
        %v211 = vld [vmem:[%s180] sm:$0xff]
        %212 = vadd.xlane.f32.xlu0 %v211
        %v213 = vpop.xlane.xlu0 %212
        %v214 = vrot.slane %v213, 4
        %v215 = vadd.f32 %v213, %v214
        %v216 = vrot.slane %v215, 2
        %v217 = vadd.f32 %v215, %v216
        %v218 = vrot.slane %v217, 1
        %v219 = vadd.f32 %v217, %v218
        %v220 = vmul.f32 %v219, 0.0009765625
        %v221 = vsub.f32 %v211, %v220
        %v222 = vmul.f32 %v221, %v221
        %223 = vadd.xlane.f32.xlu0 %v222
        %v224 = vpop.xlane.xlu0 %223
        %v225 = vrot.slane %v224, 4
        %v226 = vadd.f32 %v224, %v225
        %v227 = vrot.slane %v226, 2
        %v228 = vadd.f32 %v226, %v227
        %v229 = vrot.slane %v228, 1
        %v230 = vadd.f32 %v228, %v229
        %v231 = vmul.f32 %v230, 0.0009775171
        %v232 = vrsqrt.pop %v231
        %v233 = vmul.f32 %v231, %v232
        %vm234 = vcmp.eq.f32.partialorder %v231, inf
        %v235 = vsel %vm234, %v231, %v233
        %vm236 = vcmp.eq.f32.partialorder %v231, 0.0
        %v237 = vand.u32 %v231, 2147483648
        %v238 = vsel %vm236, %v237, %v235
        %v239 = vadd.f32 %v238, 1e-05
        %v240 = vrcp.pop %v239
        %v241 = vmul.f32 1.0, %v240
        %v242 = vld [vmem:[#allocation5] sm:$0xff]
        %v243 = vmul.f32 %v242, %v241
        %v244 = vld [vmem:[#allocation7] sm:$0xff]
        %v245 = vmul.f32 %v220, %v243
        %v246 = vsub.f32 %v244, %v245
        %v247 = vmul.f32 %v211, %v243
        %v248 = vadd.f32 %v247, %v246
        %249 = vst [vmem:[%s210] sm:$0xff] %v248
        %s250 = sand.u32 %s97, 1
        %s251 = scalar_lea.sflag [#allocation4], %s250
        %s252 = sand.u32 %s97, 1
        %s253 = smul.addr %s252, 8
        %s254 = scalar_lea.vmem [#allocation8], %s253
        // Predicated region
        $region45: #{tpu_custom_call.1} parent=31 // pred_check
          %p255 = pneg %p107
        $region46: #{tpu_custom_call.1} parent=31 // pred_check_branch
          %257 = sbr.rel (%p255) target = $region48
        $region47: #{tpu_custom_call.1} parent=31 // pred_region
          %s259 = ssub.s32 128, 128
          %260 = vsyncadd %s251, %s259
          %s261 = smul.addr %s21, 128
          %s262 = scalar_lea.hbm %s3, %s261
          %s264 = sshll.u32 %s254, 4
          %s265 = int_to_ptr.vmem [resolvable:$true] %s264
          %267 = dma.vmem_to_hbm [thread:$0]  %s265, 128, %s262, %s251
        $region48: #{tpu_custom_call.1} parent=31 // pred_fallthru
          _
      $region32: #{tpu_custom_call.1} parent=5 // pred_fallthru
        _
      %p268 = scmp.le.s32.totalorder 2, %s16
      // Predicated region
      $region49: #{tpu_custom_call.1} parent=5 // pred_check
        %p269 = pneg %p268
      $region50: #{tpu_custom_call.1} parent=5 // pred_check_branch
        %271 = sbr.rel (%p269) target = $region52
      $region51: #{tpu_custom_call.1} parent=5 // pred_region
        %s272 = ssub.s32 %s16, 2
        // Predicated region
        $region53: #{tpu_custom_call.1} parent=51 // pred_check
          %p273 = pneg %p113
        $region54: #{tpu_custom_call.1} parent=51 // pred_check_branch
          %275 = sbr.rel (%p273) target = $region56
        $region55: #{tpu_custom_call.1} parent=51 // pred_region
          %s276 = sand.u32 %s98, 1
          %s277 = scalar_lea.sflag [#allocation4], %s276
          %s278 = sand.u32 %s98, 1
          %s279 = smul.addr %s278, 8
          %s280 = scalar_lea.vmem [#allocation8], %s279
          %281 = dma.done %s277, 128
        $region56: #{tpu_custom_call.1} parent=51 // pred_fallthru
          _
      $region52: #{tpu_custom_call.1} parent=5 // pred_fallthru
        _
    $region6: #{tpu_custom_call.1} parent=1 // loop_footer
      %s20 = sadd.s32 1, %s16
    $region7: #{tpu_custom_call.1} parent=1 // loop_footer_branch
      %15 = sbr.rel target = $region3
    $region8: #{tpu_custom_call.1} parent=1 // loop_exit
      _
    %282 = vsyncpa [#allocation3], 1
    %s283 = scalar_lea.sflag [#allocation3], 1
    %284 = vsyncpa %s283, 1
    %285 = vsyncpa [#allocation6], 1
    %286 = vsyncpa [#allocation4], 1
    %s287 = scalar_lea.sflag [#allocation4], 1
    %288 = vsyncpa %s287, 1

</llo_original>
